<compile_context>
chip_gen: v6e
topology: v6e:2x2x1
jax: 0.10.0
libtpu: 0.0.40
codegen_flags: <defaults>
</compile_context>

<pallas_src>
import math

import numpy as np
import jax
import jax.numpy as jnp
from jax import lax
from jax.experimental import pallas as pl
from jax.experimental.pallas import tpu as pltpu


# ------------------------------ kernel body -------------------------------- #

def _enres_body(x_ref, halo_ref, w_ref, shift_ref, wsc_ref, o_ref, xk_ref):
    # x_ref     : (bN, C_in, tL)    input tile, NCL layout (L on the lane axis)
    # halo_ref  : (bN, 1, C_in, 2)  [..., 0] = left halo col, [..., 1] = right
    # w_ref     : (C_out, 3*C_in)   conv1 weight, tap-major, BN scale folded in
    # shift_ref : (C_out, 1)        folded BN shift (f32)
    # wsc_ref   : (C_out, C_in)     1x1 shortcut weight, or None (identity)
    # o_ref     : (bN, C_out, tL)
    # xk_ref    : (3*C_in, bN*tL)   persistent VMEM scratch (im2col operand)
    bN, C_in, tL = x_ref.shape

    for b in range(bN):                          # small static unroll (bN <= ~4)
        xb = x_ref[b]                                            # (C_in, tL)
        halo = halo_ref[b, 0]                                    # (C_in, 2)
        left = halo[:, 0:1]
        right = halo[:, 1:2]
        lane = lax.broadcasted_iota(jnp.int32, (C_in, tL), 1)
        # x[l-1]: rotate towards higher lanes, splice left halo into lane 0.
        x_prev = jnp.where(lane == 0, left, pltpu.roll(xb, 1, axis=1))
        # x[l+1]: rotate towards lower lanes (shift tL-1 == -1 mod tL),
        # splice right halo into lane tL-1.
        x_next = jnp.where(lane == tL - 1, right, pltpu.roll(xb, tL - 1, axis=1))
        c0 = b * tL
        xk_ref[0:C_in, c0:c0 + tL] = x_prev
        xk_ref[C_in:2 * C_in, c0:c0 + tL] = xb
        xk_ref[2 * C_in:3 * C_in, c0:c0 + tL] = x_next

    # One fused MXU matmul over all 3 taps (K = 3*C_in) and all folded batches.
    conv = jnp.dot(w_ref[...], xk_ref[...],
                   preferred_element_type=jnp.float32)           # (C_out, bN*tL)
    act = jnp.maximum(conv + shift_ref[...], 0.0)                # BN shift + ReLU (f32)
    # Dropout: identity in eval mode.

    x_mid = xk_ref[C_in:2 * C_in, :]                             # centre taps == x
    if wsc_ref is None:
        sc = x_mid.astype(jnp.float32)                           # identity shortcut
    else:
        sc = jnp.dot(wsc_ref[...], x_mid,
                     preferred_element_type=jnp.float32)         # 1x1-conv shortcut

    res = act + sc                                               # (C_out, bN*tL) f32
    for b in range(bN):
        o_ref[b] = res[:, b * tL:(b + 1) * tL].astype(o_ref.dtype)


def _enres_kernel_proj(x_ref, halo_ref, w_ref, shift_ref, wsc_ref, o_ref, xk_ref):
    _enres_body(x_ref, halo_ref, w_ref, shift_ref, wsc_ref, o_ref, xk_ref)


def _enres_kernel_id(x_ref, halo_ref, w_ref, shift_ref, o_ref, xk_ref):
    _enres_body(x_ref, halo_ref, w_ref, shift_ref, None, o_ref, xk_ref)


# ------------------------------ tiling logic ------------------------------- #

def _round_up(v, m):
    return -(-v // m) * m


def _vmem_capacity_bytes():
    try:
        cap = getattr(pltpu.get_tpu_info(), "vmem_capacity_bytes", None)
        if cap:
            return int(cap)
    except Exception:
        pass
    return 64 * 1024 * 1024                      # conservative: v7x per-TC VMEM


def _footprint_bytes(tL, bN, C_in, C_out, io_item):
    """Real per-step VMEM footprint: double-buffered blocks + resident weights
    + im2col scratch + f32 intermediates (v7x has only 64 MiB / TensorCore)."""
    ci, co = _round_up(C_in, 8), _round_up(C_out, 8)
    lanes = bN * tL
    b = 0
    b += 2 * bN * ci * tL * io_item                      # x blocks (double-buffered)
    b += 2 * bN * co * tL * 4                            # f32 output blocks
    b += 2 * bN * ci * 128 * io_item                     # merged halo blocks
    b += 2 * co * _round_up(3 * C_in, 128) * io_item     # fused conv weight
    b += 2 * co * 128 * 4                                # BN shift
    b += 2 * co * _round_up(C_in, 128) * io_item         # shortcut weight (worst case)
    b += _round_up(3 * C_in, 8) * lanes * io_item        # im2col scratch
    b += 2 * ci * tL * io_item                           # rolled temporaries
    b += 3 * co * lanes * 4                              # conv/act/res f32 temps
    return b


def _choose_tiles(L_pad, N, C_in, C_out, io_item, budget, tile_l=None, max_tl=2048):
    if tile_l is not None:
        tL = tile_l
    else:
        tL = 128                                  # always tile: no whole-L fallback
        t = 256
        while t <= min(L_pad, max_tl):
            if L_pad % t == 0 and _footprint_bytes(t, 1, C_in, C_out, io_item) <= budget:
                tL = t
            t += 128
    nLt = L_pad // tL
    # Fold batch elements into one block when the L tile is small (>=512 output
    # lanes / step), but keep >=2 grid steps so both v7x TensorCores get work.
    bN = 1
    if tL < 512 and N > 1:
        target = max(1, 512 // tL)
        for cand in range(min(N, target), 0, -1):
            if N % cand:
                continue
            if (N // cand) * nLt < 2 and N * nLt >= 2:
                continue
            if _footprint_bytes(tL, cand, C_in, C_out, io_item) <= budget:
                bN = cand
                break
    return tL, bN


# --------------------------------- wrapper ---------------------------------- #

def enres_block(x, w1, wsc, bn_gamma, bn_beta, bn_mean, bn_var, eps=1e-5,
                io_dtype=jnp.bfloat16, tile_l=None):
    """EnResBlock forward (eval mode).

    x   : (N, C_in, L) float32, PyTorch NCL layout.
    w1  : (C_out, C_in, 3) conv1 weight (no bias).
    wsc : (C_out, C_in) 1x1 shortcut weight, or None (requires C_in == C_out).
    io_dtype : dtype of x / weights in HBM and in the matmuls (bf16 default
               halves HBM traffic; accumulation + elementwise math stay f32).
               Pass jnp.float32 for bit-faithful eval-mode semantics.
    Returns (N, C_out, L) float32.
    """
    N, C_in, L = x.shape
    C_out = w1.shape[0]
    if wsc is None and C_in != C_out:
        raise ValueError("identity shortcut requires C_in == C_out")

    io_dtype = np.dtype(io_dtype)
    if io_dtype != np.dtype(jnp.float32) and C_in % 2:
        io_dtype = np.dtype(jnp.float32)     # odd C_in: avoid split-sublane packing
    io_item = io_dtype.itemsize

    # Fold eval-mode BatchNorm into the conv weight and a per-channel shift.
    scale = (bn_gamma.astype(jnp.float32)
             / jnp.sqrt(bn_var.astype(jnp.float32) + eps))             # (C_out,)
    shift = (bn_beta.astype(jnp.float32)
             - bn_mean.astype(jnp.float32) * scale).reshape(C_out, 1)  # f32
    # (C_out, C_in, 3) -> tap-major (C_out, 3*C_in) matching [x_prev; x; x_next].
    w_fused = (jnp.transpose(w1.astype(jnp.float32), (0, 2, 1))
               .reshape(C_out, 3 * C_in) * scale[:, None]).astype(io_dtype)

    vmem_limit = min(int(_vmem_capacity_bytes() * 0.75), 96 * 1024 * 1024)
    budget = int(vmem_limit * 0.6)

    if tile_l is not None:
        if tile_l % 128:
            raise ValueError("tile_l must be a multiple of 128")
        L_pad = _round_up(L, tile_l)
    else:
        L_pad = _round_up(L, 128)              # lane-dense stores, always tiled
    tL, bN = _choose_tiles(L_pad, N, C_in, C_out, io_item, budget, tile_l)
    nLt = L_pad // tL

    xp = x.astype(jnp.float32)
    if L_pad != L:
        xp = jnp.pad(xp, ((0, 0), (0, 0), (0, L_pad - L)))
    xp = xp.astype(io_dtype)

    # Merged left/right halo columns: ONE (N, nLt, C_in, 2) array -> a single
    # tiny DMA per grid step (instead of two).
    jidx = jnp.arange(nLt)

    def _gather(idx):
        valid = (idx >= 0) & (idx < L_pad)
        cols = jnp.take(xp, jnp.clip(idx, 0, L_pad - 1), axis=2)   # (N, C_in, nLt)
        return jnp.where(valid[None, None, :], cols, jnp.zeros((), io_dtype))

    halo = jnp.stack([_gather(jidx * tL - 1), _gather(jidx * tL + tL)], axis=-1)
    halo = jnp.transpose(halo, (0, 2, 1, 3))                       # (N, nLt, C_in, 2)

    in_specs = [
        pl.BlockSpec((bN, C_in, tL), lambda n, j: (n, 0, j)),
        pl.BlockSpec((bN, 1, C_in, 2), lambda n, j: (n, j, 0, 0)),
        pl.BlockSpec((C_out, 3 * C_in), lambda n, j: (0, 0)),
        pl.BlockSpec((C_out, 1), lambda n, j: (0, 0)),
    ]
    args = [xp, halo, w_fused, shift]
    if wsc is None:
        kernel = _enres_kernel_id               # no shortcut matmul, no wsc DMA
        sc_bytes, sc_flops = 0, 0
    else:
        kernel = _enres_kernel_proj
        in_specs.append(pl.BlockSpec((C_out, C_in), lambda n, j: (0, 0)))
        args.append(wsc.astype(io_dtype))
        sc_bytes = C_out * C_in * io_item
        sc_flops = 2 * N * L_pad * C_out * C_in

    cost = pl.CostEstimate(
        flops=2 * N * L_pad * C_out * 3 * C_in + sc_flops,
        transcendentals=0,
        bytes_accessed=(N * C_in * L_pad * io_item
                        + N * C_out * L_pad * 4
                        + N * nLt * C_in * 2 * io_item
                        + C_out * 3 * C_in * io_item + C_out * 4 + sc_bytes),
    )

    out = pl.pallas_call(
        kernel,
        out_shape=jax.ShapeDtypeStruct((N, C_out, L_pad), jnp.float32),
        grid_spec=pltpu.PrefetchScalarGridSpec(
            num_scalar_prefetch=0,
            grid=(N // bN, nLt),
            in_specs=in_specs,
            out_specs=pl.BlockSpec((bN, C_out, tL), lambda n, j: (n, 0, j)),
            scratch_shapes=[pltpu.VMEM((3 * C_in, bN * tL), io_dtype)],
        ),
        compiler_params=pltpu.CompilerParams(
            dimension_semantics=("parallel", "parallel"),
            vmem_limit_bytes=vmem_limit,
        ),
        cost_estimate=cost,
    )(*args)

    return out[:, :, :L] if L_pad != L else out


# -------------------------------- reference --------------------------------- #

def _reference(x, w1, wsc, gamma, beta, mean, var, eps=1e-5):
    # Pure-JAX mirror of the PyTorch module in eval mode.
    N, C_in, L = x.shape
    xp = jnp.pad(x, ((0, 0), (0, 0), (1, 1)))
    conv = sum(jnp.einsum('oi,nil->nol', w1[:, :, k], xp[:, :, k:k + L])
               for k in range(3))
    inv = 1.0 / jnp.sqrt(var + eps)
    bn = ((conv - mean[None, :, None]) * inv[None, :, None]
          * gamma[None, :, None] + beta[None, :, None])
    act = jnp.maximum(bn, 0.0)
    sc = x if wsc is None else jnp.einsum('oi,nil->nol', wsc, x)
    return act + sc


if __name__ == "__main__":
    key = jax.random.PRNGKey(0)
    ks = jax.random.split(key, 9)

    # ---- case 1: C_in != C_out -> 1x1-conv shortcut (projection kernel) ----
    N, C_in, C_out, L = 2, 8, 16, 16
    x = jax.random.normal(ks[0], (N, C_in, L), dtype=jnp.float32)
    a = math.sqrt(6.0 / (C_in * 3 + C_out * 3))                 # xavier_uniform_
    w1 = jax.random.uniform(ks[1], (C_out, C_in, 3), minval=-a, maxval=a,
                            dtype=jnp.float32)
    b = 1.0 / math.sqrt(C_in)
    wsc = jax.random.uniform(ks[2], (C_out, C_in), minval=-b, maxval=b,
                             dtype=jnp.float32)
    gamma = 1.0 + 0.1 * jax.random.normal(ks[3], (C_out,), dtype=jnp.float32)
    beta = 0.1 * jax.random.normal(ks[4], (C_out,), dtype=jnp.float32)
    r_mean = 0.05 * jnp.arange(C_out, dtype=jnp.float32)
    r_var = jnp.ones((C_out,), jnp.float32) + 0.1

    ref = _reference(x, w1, wsc, gamma, beta, r_mean, r_var)

    # (a) f32 I/O: bit-faithful eval-mode semantics, tight tolerance.
    out = jax.block_until_ready(
        enres_block(x, w1, wsc, gamma, beta, r_mean, r_var, io_dtype=jnp.float32))
    assert out.shape == (N, C_out, L)
    assert jnp.allclose(out, ref, rtol=1e-4, atol=1e-4), \
        float(jnp.max(jnp.abs(out - ref)))

    # (b) default bf16 I/O (f32 accumulation): looser tolerance.
    out_bf = jax.block_until_ready(
        enres_block(x, w1, wsc, gamma, beta, r_mean, r_var))
    assert out_bf.shape == (N, C_out, L)
    assert jnp.allclose(out_bf, ref, rtol=1e-1, atol=1e-1), \
        float(jnp.max(jnp.abs(out_bf - ref)))

    # ---- case 2: C_in == C_out -> identity shortcut, multi-tile + halos ----
    C, L2 = 8, 300          # unaligned L -> padded to 384; tile_l=128 -> 3 tiles
    x2 = jax.random.normal(ks[5], (N, C, L2), dtype=jnp.float32)
    a2 = math.sqrt(6.0 / (C * 3 + C * 3))
    w1b = jax.random.uniform(ks[6], (C, C, 3), minval=-a2, maxval=a2,
                             dtype=jnp.float32)
    g2 = 1.0 + 0.1 * jax.random.normal(ks[7], (C,), dtype=jnp.float32)
    b2 = 0.1 * jax.random.normal(ks[8], (C,), dtype=jnp.float32)
    m2 = 0.05 * jnp.arange(C, dtype=jnp.float32)
    v2 = jnp.ones((C,), jnp.float32) + 0.1

    out2 = jax.block_until_ready(
        enres_block(x2, w1b, None, g2, b2, m2, v2,
                    io_dtype=jnp.float32, tile_l=128))
    ref2 = _reference(x2, w1b, None, g2, b2, m2, v2)
    assert out2.shape == (N, C, L2)
    assert jnp.allclose(out2, ref2, rtol=1e-4, atol=1e-4), \
        float(jnp.max(jnp.abs(out2 - ref2)))

    print("KERNEL_OK")
</pallas_src>

<mosaic_0001>
module attributes {stable_mosaic.version = 11 : i64} {
  func.func @_enres_kernel_proj(%arg0: i32, %arg1: i32, %arg2: memref<1x8x128xf32, #tpu.memory_space<vmem>>, %arg3: memref<1x1x8x2xf32, #tpu.memory_space<vmem>>, %arg4: memref<16x24xf32, #tpu.memory_space<vmem>>, %arg5: memref<16x1xf32, #tpu.memory_space<vmem>>, %arg6: memref<16x8xf32, #tpu.memory_space<vmem>>, %arg7: memref<1x16x128xf32, #tpu.memory_space<vmem>>, %arg8: memref<24x128xf32, #tpu.memory_space<vmem>>) attributes {dimension_semantics = [#tpu.dimension_semantics<parallel>, #tpu.dimension_semantics<parallel>], iteration_bounds = array<i64: 2, 1>, scalar_prefetch = 0 : i64, scratch_operands = 1 : i64, tpu.core_type = #tpu.core_type<tc>, window_params = [{transform_indices = @transform_0, window_bounds = array<i64: 1, 8, 128>}, {transform_indices = @transform_1, window_bounds = array<i64: 1, 1, 8, 2>}, {pipeline_mode = #tpu.pipeline_mode<synchronous>, transform_indices = @transform_2, window_bounds = array<i64: 16, 24>}, {pipeline_mode = #tpu.pipeline_mode<synchronous>, transform_indices = @transform_3, window_bounds = array<i64: 16, 1>}, {pipeline_mode = #tpu.pipeline_mode<synchronous>, transform_indices = @transform_4, window_bounds = array<i64: 16, 8>}, {transform_indices = @transform_5, window_bounds = array<i64: 1, 16, 128>}]} {
    %c0 = arith.constant 0 : index
    %c0_0 = arith.constant 0 : index
    %c0_1 = arith.constant 0 : index
    %0 = vector.load %arg2[%c0, %c0_0, %c0_1] : memref<1x8x128xf32, #tpu.memory_space<vmem>>, vector<1x8x128xf32>
    %1 = vector.shape_cast %0 : vector<1x8x128xf32> to vector<8x128xf32>
    %c0_2 = arith.constant 0 : index
    %c0_3 = arith.constant 0 : index
    %c0_4 = arith.constant 0 : index
    %c0_5 = arith.constant 0 : index
    %2 = vector.load %arg3[%c0_2, %c0_3, %c0_4, %c0_5] : memref<1x1x8x2xf32, #tpu.memory_space<vmem>>, vector<1x1x8x2xf32>
    %3 = vector.shape_cast %2 : vector<1x1x8x2xf32> to vector<8x2xf32>
    %4 = vector.extract_strided_slice %3 {offsets = [0, 0], sizes = [8, 1], strides = [1, 1]} : vector<8x2xf32> to vector<8x1xf32>
    %5 = vector.extract_strided_slice %3 {offsets = [0, 1], sizes = [8, 1], strides = [1, 1]} : vector<8x2xf32> to vector<8x1xf32>
    %6 = tpu.iota {dimensions = array<i32: 1>} : vector<8x128xi32>
    %c0_i32 = arith.constant 0 : i32
    %7 = vector.broadcast %c0_i32 : i32 to vector<8x128xi32>
    %8 = arith.cmpi eq, %6, %7 : vector<8x128xi32>
    %c1_i32 = arith.constant 1 : i32
    %9 = tpu.dynamic_rotate %1 by %c1_i32 dim 1 : vector<8x128xf32>, i32 -> vector<8x128xf32>
    %10 = vector.shape_cast %4 : vector<8x1xf32> to vector<8x1xf32>
    %11 = vector.broadcast %10 : vector<8x1xf32> to vector<8x128xf32>
    %12 = arith.select %8, %11, %9 : vector<8x128xi1>, vector<8x128xf32>
    %c127_i32 = arith.constant 127 : i32
    %13 = vector.broadcast %c127_i32 : i32 to vector<8x128xi32>
    %14 = arith.cmpi eq, %6, %13 : vector<8x128xi32>
    %c127_i32_6 = arith.constant 127 : i32
    %15 = tpu.dynamic_rotate %1 by %c127_i32_6 dim 1 : vector<8x128xf32>, i32 -> vector<8x128xf32>
    %16 = vector.shape_cast %5 : vector<8x1xf32> to vector<8x1xf32>
    %17 = vector.broadcast %16 : vector<8x1xf32> to vector<8x128xf32>
    %18 = arith.select %14, %17, %15 : vector<8x128xi1>, vector<8x128xf32>
    %c0_7 = arith.constant 0 : index
    %c0_8 = arith.constant 0 : index
    %19 = vector.load %arg8[%c0_7, %c0_8] : memref<24x128xf32, #tpu.memory_space<vmem>>, vector<8x128xf32>
    tpu.vector_store %arg8[%c0_7, %c0_8], %12 {strides = array<i32>} : memref<24x128xf32, #tpu.memory_space<vmem>>, vector<8x128xf32>,
    %c8 = arith.constant 8 : index
    %c0_9 = arith.constant 0 : index
    %20 = vector.load %arg8[%c8, %c0_9] : memref<24x128xf32, #tpu.memory_space<vmem>>, vector<8x128xf32>
    tpu.vector_store %arg8[%c8, %c0_9], %1 {strides = array<i32>} : memref<24x128xf32, #tpu.memory_space<vmem>>, vector<8x128xf32>,
    %c16 = arith.constant 16 : index
    %c0_10 = arith.constant 0 : index
    %21 = vector.load %arg8[%c16, %c0_10] : memref<24x128xf32, #tpu.memory_space<vmem>>, vector<8x128xf32>
    tpu.vector_store %arg8[%c16, %c0_10], %18 {strides = array<i32>} : memref<24x128xf32, #tpu.memory_space<vmem>>, vector<8x128xf32>,
    %c0_11 = arith.constant 0 : index
    %c0_12 = arith.constant 0 : index
    %22 = vector.load %arg4[%c0_11, %c0_12] : memref<16x24xf32, #tpu.memory_space<vmem>>, vector<16x24xf32>
    %c0_13 = arith.constant 0 : index
    %c0_14 = arith.constant 0 : index
    %23 = vector.load %arg8[%c0_13, %c0_14] : memref<24x128xf32, #tpu.memory_space<vmem>>, vector<24x128xf32>
    %cst = arith.constant dense<0.000000e+00> : vector<16x128xf32>
    %24 = tpu.matmul %22, %23, %cst {dimension_numbers = #tpu.dot_dimension_numbers<[1], [0], [0], [1], [0, 0, 1, 1], [], []>} : vector<16x24xf32>, vector<24x128xf32>, vector<16x128xf32> -> vector<16x128xf32>
    %c0_15 = arith.constant 0 : index
    %c0_16 = arith.constant 0 : index
    %25 = vector.load %arg5[%c0_15, %c0_16] : memref<16x1xf32, #tpu.memory_space<vmem>>, vector<16x1xf32>
    %26 = vector.broadcast %25 : vector<16x1xf32> to vector<16x128xf32>
    %27 = arith.addf %24, %26 : vector<16x128xf32>
    %cst_17 = arith.constant 0.000000e+00 : f32
    %28 = vector.broadcast %cst_17 : f32 to vector<16x128xf32>
    %29 = arith.maximumf %27, %28 : vector<16x128xf32>
    %c8_18 = arith.constant 8 : index
    %c0_19 = arith.constant 0 : index
    %30 = vector.load %arg8[%c8_18, %c0_19] : memref<24x128xf32, #tpu.memory_space<vmem>>, vector<8x128xf32>
    %c0_20 = arith.constant 0 : index
    %c0_21 = arith.constant 0 : index
    %31 = vector.load %arg6[%c0_20, %c0_21] : memref<16x8xf32, #tpu.memory_space<vmem>>, vector<16x8xf32>
    %cst_22 = arith.constant dense<0.000000e+00> : vector<16x128xf32>
    %32 = tpu.matmul %31, %30, %cst_22 {dimension_numbers = #tpu.dot_dimension_numbers<[1], [0], [0], [1], [0, 0, 1, 1], [], []>} : vector<16x8xf32>, vector<8x128xf32>, vector<16x128xf32> -> vector<16x128xf32>
    %33 = arith.addf %29, %32 : vector<16x128xf32>
    %c0_23 = arith.constant 0 : index
    %c0_24 = arith.constant 0 : index
    %c0_25 = arith.constant 0 : index
    %34 = vector.load %arg7[%c0_23, %c0_24, %c0_25] : memref<1x16x128xf32, #tpu.memory_space<vmem>>, vector<1x16x128xf32>
    %35 = vector.shape_cast %34 : vector<1x16x128xf32> to vector<16x128xf32>
    %36 = vector.shape_cast %33 : vector<16x128xf32> to vector<1x16x128xf32>
    tpu.vector_store %arg7[%c0_23, %c0_24, %c0_25], %36 {strides = array<i32>} : memref<1x16x128xf32, #tpu.memory_space<vmem>>, vector<1x16x128xf32>,
    return
  }
  func.func @transform_0(%arg0: i32, %arg1: i32) -> (i32, i32, i32) {
    %c0_i32 = arith.constant 0 : i32
    %c0_i32_0 = arith.constant 0 : i32
    return %arg0, %c0_i32, %arg1 : i32, i32, i32
  }
  func.func @transform_1(%arg0: i32, %arg1: i32) -> (i32, i32, i32, i32) {
    %c0_i32 = arith.constant 0 : i32
    %c0_i32_0 = arith.constant 0 : i32
    %c0_i32_1 = arith.constant 0 : i32
    return %arg0, %arg1, %c0_i32, %c0_i32_0 : i32, i32, i32, i32
  }
  func.func @transform_2(%arg0: i32, %arg1: i32) -> (i32, i32) {
    %c0_i32 = arith.constant 0 : i32
    %c0_i32_0 = arith.constant 0 : i32
    %c0_i32_1 = arith.constant 0 : i32
    return %c0_i32, %c0_i32_0 : i32, i32
  }
  func.func @transform_3(%arg0: i32, %arg1: i32) -> (i32, i32) {
    %c0_i32 = arith.constant 0 : i32
    %c0_i32_0 = arith.constant 0 : i32
    %c0_i32_1 = arith.constant 0 : i32
    return %c0_i32, %c0_i32_0 : i32, i32
  }
  func.func @transform_4(%arg0: i32, %arg1: i32) -> (i32, i32) {
    %c0_i32 = arith.constant 0 : i32
    %c0_i32_0 = arith.constant 0 : i32
    %c0_i32_1 = arith.constant 0 : i32
    return %c0_i32, %c0_i32_0 : i32, i32
  }
  func.func @transform_5(%arg0: i32, %arg1: i32) -> (i32, i32, i32) {
    %c0_i32 = arith.constant 0 : i32
    %c0_i32_0 = arith.constant 0 : i32
    return %arg0, %c0_i32, %arg1 : i32, i32, i32
  }
}

</mosaic_0001>

<llo_original>
// kernel: tpu_custom_call.1
$region0: #{tpu_custom_call.1}
  #allocation0 [shape = 'u32[]', space=smem, size = 0x4, offset = 0x4, fixed_abs, tag = 'smem constant byte address 0x4 - core index']
  #allocation1 [shape = 'u32[144,128]{1,0:T(1,128)}', space=vmem, size = 0x12000, scoped, tag = 'internal scratch']
  #allocation2 [shape = 'f32[24,128]{1,0:T(8,128)}', space=vmem, size = 0x3000, scoped, tag = 'scratch operand']
  %s0 = inlined_call_operand.vmem [shape: f32[2,8,128], index: 0, kind: input, shape index: {}]
  %s1 = inlined_call_operand.vmem [shape: f32[2,1,8,2], index: 1, kind: input, shape index: {}]
  %s2 = inlined_call_operand.vmem [shape: f32[16,24], index: 2, kind: input, shape index: {}]
  %s3 = inlined_call_operand.vmem [shape: f32[16,1], index: 3, kind: input, shape index: {}]
  %s4 = inlined_call_operand.vmem [shape: f32[16,8], index: 4, kind: input, shape index: {}]
  %s5 = inlined_call_operand.hbm [shape: f32[2,16,128], index: 5, kind: output, shape index: {}]
  %s6 = sld [smem:[#allocation0]]
  $region53: #{tpu_custom_call.1} parent=0
    _
  %s8 = ssub.s32 1, %s6
  %s9 = scalar_select 0, %s8, %s6
  $region1: #{tpu_custom_call.1} parent=0
    #allocation3 [shape = 'u8[16384]{0}', space=vmem, size = 0x4000, scoped, tag = 'output window, operand 0']
    #allocation4 [shape = 's32[2]{0}', space=sflag, size = 0x8, scoped, tag = 'scoped memory for tpu_custom_call.1']
    %10 = vsyncpa [#allocation4], 0
    %s11 = scalar_lea.sflag [#allocation4], 1
    %12 = vsyncpa %s11, 0
    loop: start=0, step=1, limit=4
    $region2: #{tpu_custom_call.1} parent=1 // loop_pre_header
      _
    $region3: #{tpu_custom_call.1} parent=1 // loop_header
      %s14 = sphi 0, %s18
      %p15 = scmp.ge.s32.totalorder %s14, 4
      %s21 = sphi 0, %s33
      %s22 = sphi 0, %s29
      %s23 = sphi 0, %s21
      %s24 = sphi 0, %s22
      %s25 = sphi 0, %s23
      %s26 = sphi 0, %s24
      %s38 = sphi 0, %s40
      %s41 = sphi 0, %s38
      %s42 = sphi 0, %s41
      %s58 = sphi 0, %s42
      %s66 = sphi 0, %s68
      %s69 = sphi 0, %s66
      %s70 = sphi 0, %s69
      %s86 = sphi 0, %s70
      %s90 = sphi 0, %s90
      %s92 = sphi 0, %s90
      %s93 = sphi 0, %s92
      %s107 = sphi 0, %s93
      %s111 = sphi 0, %s111
      %s113 = sphi 0, %s111
      %s114 = sphi 0, %s113
      %s128 = sphi 0, %s114
      %s132 = sphi 0, %s132
      %s134 = sphi 0, %s132
      %s135 = sphi 0, %s134
      %s149 = sphi 0, %s135
      %s157 = sphi 0, %s159
      %s160 = sphi 0, %s157
      %s161 = sphi 0, %s160
      %s177 = sphi 0, %s161
    $region4: #{tpu_custom_call.1} parent=1 // loop_header_branch
      %17 = sbr.rel (%p15) target = $region8
    $region5: #{tpu_custom_call.1} parent=1 // loop_body
      %s19 = ssub.s32 %s14, 1
      %s20 = ssub.s32 %s14, 2
      %s27 = sadd.s32 1, %s22
      %p28 = scmp.ge.s32.totalorder %s27, 1
      %s29 = scalar_select %p28, 0, %s27
      %s30 = sadd.s32 1, %s21
      %s31 = scalar_select %p28, %s30, %s21
      %p32 = scmp.ge.s32.totalorder %s31, 2
      %s33 = scalar_select %p32, 0, %s31
      %s34 = ssub.s32 %s21, %s33
      %s35 = ssub.s32 %s22, %s29
      %s36 = sor.u32 %s34, %s35
      %p37 = scmp.eq.s32.totalorder %s36, 0
      %s39 = sadd.s32 %s38, 1
      %s40 = scalar_select %p37, %s38, %s39
      %p43 = pneg %p37
      %p44 = scmp.eq.s32.totalorder %s14, 1
      %p45 = por %p43, %p44
      %p46 = scmp.ne.s32.totalorder %s38, %s41
      %p47 = scmp.eq.s32.totalorder %s14, 0
      %p48 = por %p46, %p47
      %p49 = scmp.ne.s32.totalorder %s38, %s41
      %p50 = scmp.eq.s32.totalorder %s19, 1
      %p51 = por %p49, %p50
      %p52 = scmp.ne.s32.totalorder %s41, %s42
      %p53 = scmp.eq.s32.totalorder %s19, 0
      %p54 = por %p52, %p53
      %p55 = scmp.ne.s32.totalorder %s41, %s42
      %p56 = scmp.eq.s32.totalorder %s20, 1
      %p57 = por %p55, %p56
      %p59 = scmp.ne.s32.totalorder %s42, %s58
      %p60 = scmp.eq.s32.totalorder %s20, 0
      %p61 = por %p59, %p60
      %s62 = ssub.s32 %s21, %s33
      %s63 = ssub.s32 %s22, %s29
      %s64 = sor.u32 %s62, %s63
      %p65 = scmp.eq.s32.totalorder %s64, 0
      %s67 = sadd.s32 %s66, 1
      %s68 = scalar_select %p65, %s66, %s67
      %p71 = pneg %p65
      %p72 = scmp.eq.s32.totalorder %s14, 1
      %p73 = por %p71, %p72
      %p74 = scmp.ne.s32.totalorder %s66, %s69
      %p75 = scmp.eq.s32.totalorder %s14, 0
      %p76 = por %p74, %p75
      %p77 = scmp.ne.s32.totalorder %s66, %s69
      %p78 = scmp.eq.s32.totalorder %s19, 1
      %p79 = por %p77, %p78
      %p80 = scmp.ne.s32.totalorder %s69, %s70
      %p81 = scmp.eq.s32.totalorder %s19, 0
      %p82 = por %p80, %p81
      %p83 = scmp.ne.s32.totalorder %s69, %s70
      %p84 = scmp.eq.s32.totalorder %s20, 1
      %p85 = por %p83, %p84
      %p87 = scmp.ne.s32.totalorder %s70, %s86
      %p88 = scmp.eq.s32.totalorder %s20, 0
      %p89 = por %p87, %p88
      %s91 = sadd.s32 %s90, 1
      %p94 = scmp.eq.s32.totalorder %s14, 1
      %p95 = scmp.ne.s32.totalorder %s90, %s92
      %p96 = scmp.eq.s32.totalorder %s14, 0
      %p97 = por %p95, %p96
      %p98 = scmp.ne.s32.totalorder %s90, %s92
      %p99 = scmp.eq.s32.totalorder %s19, 1
      %p100 = por %p98, %p99
      %p101 = scmp.ne.s32.totalorder %s92, %s93
      %p102 = scmp.eq.s32.totalorder %s19, 0
      %p103 = por %p101, %p102
      %p104 = scmp.ne.s32.totalorder %s92, %s93
      %p105 = scmp.eq.s32.totalorder %s20, 1
      %p106 = por %p104, %p105
      %p108 = scmp.ne.s32.totalorder %s93, %s107
      %p109 = scmp.eq.s32.totalorder %s20, 0
      %p110 = por %p108, %p109
      %s112 = sadd.s32 %s111, 1
      %p115 = scmp.eq.s32.totalorder %s14, 1
      %p116 = scmp.ne.s32.totalorder %s111, %s113
      %p117 = scmp.eq.s32.totalorder %s14, 0
      %p118 = por %p116, %p117
      %p119 = scmp.ne.s32.totalorder %s111, %s113
      %p120 = scmp.eq.s32.totalorder %s19, 1
      %p121 = por %p119, %p120
      %p122 = scmp.ne.s32.totalorder %s113, %s114
      %p123 = scmp.eq.s32.totalorder %s19, 0
      %p124 = por %p122, %p123
      %p125 = scmp.ne.s32.totalorder %s113, %s114
      %p126 = scmp.eq.s32.totalorder %s20, 1
      %p127 = por %p125, %p126
      %p129 = scmp.ne.s32.totalorder %s114, %s128
      %p130 = scmp.eq.s32.totalorder %s20, 0
      %p131 = por %p129, %p130
      %s133 = sadd.s32 %s132, 1
      %p136 = scmp.eq.s32.totalorder %s14, 1
      %p137 = scmp.ne.s32.totalorder %s132, %s134
      %p138 = scmp.eq.s32.totalorder %s14, 0
      %p139 = por %p137, %p138
      %p140 = scmp.ne.s32.totalorder %s132, %s134
      %p141 = scmp.eq.s32.totalorder %s19, 1
      %p142 = por %p140, %p141
      %p143 = scmp.ne.s32.totalorder %s134, %s135
      %p144 = scmp.eq.s32.totalorder %s19, 0
      %p145 = por %p143, %p144
      %p146 = scmp.ne.s32.totalorder %s134, %s135
      %p147 = scmp.eq.s32.totalorder %s20, 1
      %p148 = por %p146, %p147
      %p150 = scmp.ne.s32.totalorder %s135, %s149
      %p151 = scmp.eq.s32.totalorder %s20, 0
      %p152 = por %p150, %p151
      %s153 = ssub.s32 %s21, %s33
      %s154 = ssub.s32 %s22, %s29
      %s155 = sor.u32 %s153, %s154
      %p156 = scmp.eq.s32.totalorder %s155, 0
      %s158 = sadd.s32 %s157, 1
      %s159 = scalar_select %p156, %s157, %s158
      %p162 = pneg %p156
      %p163 = scmp.eq.s32.totalorder %s14, 1
      %p164 = por %p162, %p163
      %p165 = scmp.ne.s32.totalorder %s157, %s160
      %p166 = scmp.eq.s32.totalorder %s14, 0
      %p167 = por %p165, %p166
      %p168 = scmp.ne.s32.totalorder %s157, %s160
      %p169 = scmp.eq.s32.totalorder %s19, 1
      %p170 = por %p168, %p169
      %p171 = scmp.ne.s32.totalorder %s160, %s161
      %p172 = scmp.eq.s32.totalorder %s19, 0
      %p173 = por %p171, %p172
      %p174 = scmp.ne.s32.totalorder %s160, %s161
      %p175 = scmp.eq.s32.totalorder %s20, 1
      %p176 = por %p174, %p175
      %p178 = scmp.ne.s32.totalorder %s161, %s177
      %p179 = scmp.eq.s32.totalorder %s20, 0
      %p180 = por %p178, %p179
      %p181 = scmp.le.s32.totalorder 1, %s14
      %p182 = scmp.lt.s32.totalorder %s14, 3
      %p183 = pnand %p181, %p182
      %p184 = pneg %p183
      // Predicated region
      $region9: #{tpu_custom_call.1} parent=5 // pred_check
        _
      $region10: #{tpu_custom_call.1} parent=5 // pred_check_branch
        %186 = sbr.rel (%p183) target = $region12
      $region11: #{tpu_custom_call.1} parent=5 // pred_region
        %s187 = ssub.s32 %s14, 1
        // Predicated region
        $region13: #{tpu_custom_call.1} parent=11 // pred_check
          %p188 = pneg %p103
        $region14: #{tpu_custom_call.1} parent=11 // pred_check_branch
          %190 = sbr.rel (%p188) target = $region16
        $region15: #{tpu_custom_call.1} parent=11 // pred_region
          _
        $region16: #{tpu_custom_call.1} parent=11 // pred_fallthru
          _
        // Predicated region
        $region17: #{tpu_custom_call.1} parent=11 // pred_check
          %p191 = pneg %p124
        $region18: #{tpu_custom_call.1} parent=11 // pred_check_branch
          %193 = sbr.rel (%p191) target = $region20
        $region19: #{tpu_custom_call.1} parent=11 // pred_region
          _
        $region20: #{tpu_custom_call.1} parent=11 // pred_fallthru
          _
        // Predicated region
        $region21: #{tpu_custom_call.1} parent=11 // pred_check
          %p194 = pneg %p145
        $region22: #{tpu_custom_call.1} parent=11 // pred_check_branch
          %196 = sbr.rel (%p194) target = $region24
        $region23: #{tpu_custom_call.1} parent=11 // pred_region
          _
        $region24: #{tpu_custom_call.1} parent=11 // pred_fallthru
          _
      $region12: #{tpu_custom_call.1} parent=5 // pred_fallthru
        _
      %p197 = scmp.lt.s32.totalorder %s14, 2
      // Predicated region
      $region25: #{tpu_custom_call.1} parent=5 // pred_check
        %p198 = pneg %p197
      $region26: #{tpu_custom_call.1} parent=5 // pred_check_branch
        %200 = sbr.rel (%p198) target = $region28
      $region27: #{tpu_custom_call.1} parent=5 // pred_region
        // Predicated region
        $region29: #{tpu_custom_call.1} parent=27 // pred_check
          %p201 = pneg %p48
        $region30: #{tpu_custom_call.1} parent=27 // pred_check_branch
          %203 = sbr.rel (%p201) target = $region32
        $region31: #{tpu_custom_call.1} parent=27 // pred_region
          %p204 = scmp.lt.s32.totalorder %s21, 1
          %s205 = scalar_select %p204, %s21, 1
          %p206 = scmp.lt.s32.totalorder %s22, 0
          %s207 = scalar_select %p206, %s22, 0
          %s208 = sadd.s32 %s207, %s205
          %s209 = smul.addr %s208, 8
          %s210 = scalar_lea.vmem %s0, %s209
        $region32: #{tpu_custom_call.1} parent=27 // pred_fallthru
          _
        // Predicated region
        $region33: #{tpu_custom_call.1} parent=27 // pred_check
          %p211 = pneg %p76
        $region34: #{tpu_custom_call.1} parent=27 // pred_check_branch
          %213 = sbr.rel (%p211) target = $region36
        $region35: #{tpu_custom_call.1} parent=27 // pred_region
          %p214 = scmp.lt.s32.totalorder %s21, 1
          %s215 = scalar_select %p214, %s21, 1
          %p216 = scmp.lt.s32.totalorder %s22, 0
          %s217 = scalar_select %p216, %s22, 0
          %s218 = sadd.s32 %s217, %s215
          %s219 = smul.addr %s218, 8
          %s220 = scalar_lea.vmem %s1, %s219
        $region36: #{tpu_custom_call.1} parent=27 // pred_fallthru
          _
      $region28: #{tpu_custom_call.1} parent=5 // pred_fallthru
        _
      %p221 = scmp.le.s32.totalorder 1, %s14
      %p222 = scmp.lt.s32.totalorder %s14, 3
      %p223 = pnand %p221, %p222
      %p224 = pneg %p223
      // Predicated region
      $region37: #{tpu_custom_call.1} parent=5 // pred_check
        _
      $region38: #{tpu_custom_call.1} parent=5 // pred_check_branch
        %226 = sbr.rel (%p223) target = $region40
      $region39: #{tpu_custom_call.1} parent=5 // pred_region
        %s227 = ssub.s32 %s14, 1
        %p228 = scmp.lt.s32.totalorder %s23, 1
        %s229 = scalar_select %p228, %s23, 1
        %p230 = scmp.lt.s32.totalorder %s24, 0
        %s231 = scalar_select %p230, %s24, 0
        %s232 = sadd.s32 %s231, %s229
        %s233 = smul.addr %s232, 8
        %s234 = scalar_lea.vmem %s0, %s233
        %p235 = pneg %p54
        %p236 = pneg %p51
        %p237 = scmp.lt.s32.totalorder %s23, 1
        %s238 = scalar_select %p237, %s23, 1
        %p239 = scmp.lt.s32.totalorder %s24, 0
        %s240 = scalar_select %p239, %s24, 0
        %s241 = sadd.s32 %s240, %s238
        %s242 = smul.addr %s241, 8
        %s243 = scalar_lea.vmem %s1, %s242
        %p244 = pneg %p82
        %p245 = pneg %p79
        %p246 = pneg %p103
        %p247 = pneg %p100
        %p248 = pneg %p124
        %p249 = pneg %p121
        %p250 = pneg %p145
        %p251 = pneg %p142
        %p252 = pneg %p173
        %p253 = pneg %p170
        %s254 = sand.u32 %s160, 1
        %s255 = scalar_lea.sflag [#allocation4], %s254
        %s256 = sand.u32 %s160, 1
        %s257 = smul.addr %s256, 16
        %s258 = scalar_lea.vmem [#allocation3], %s257
        %p259 = scmp.lt.s32.totalorder %s23, 1
        %s260 = scalar_select %p259, %s23, 1
        %p261 = scmp.lt.s32.totalorder %s24, 0
        %s262 = scalar_select %p261, %s24, 0
        %s263 = sadd.s32 %s262, %s260
        %s264 = smul.addr %s263, 8
        %s265 = scalar_lea.vmem %s0, %s264
        %p266 = scmp.lt.s32.totalorder %s23, 1
        %s267 = scalar_select %p266, %s23, 1
        %p268 = scmp.lt.s32.totalorder %s24, 0
        %s269 = scalar_select %p268, %s24, 0
        %s270 = sadd.s32 %s269, %s267
        %s271 = smul.addr %s270, 8
        %s272 = scalar_lea.vmem %s1, %s271
        %v273 = vld [vmem:[%s265] sm:$0xff]
        %v274 = vld [vmem:[%s272] sm:$0xff]
        %v275 = vlaneseq
        %v276 = vand.u32 %v275, 127
        %vm277 = vcmp.eq.s32.totalorder %v276, 0
        %278 = vrot.lane.b32.xlu0 %v273, 1
        %v279 = vpop.permute.xlu0 %278
        %281 = vset.pattern.permute.xlu0 0
        %282 = vperm.xlu0 %281, %v274
        %v283 = vpop.permute.xlu0 %282
        %v285 = vsel %vm277, %v283, %v279
        %vm286 = vcmp.eq.s32.totalorder %v276, 127
        %287 = vrot.lane.b32.xlu0 %v273, 127
        %v288 = vpop.permute.xlu0 %287
        %289 = vset.pattern.permute.xlu0 1
        %290 = vperm.xlu0 %289, %v274
        %v291 = vpop.permute.xlu0 %290
        %v293 = vsel %vm286, %v291, %v288
        %294 = vst [vmem:[#allocation2] sm:$0xff] %v285
        %295 = vst [vmem:[#allocation2 + $0x8] sm:$0xff] %v273
        %296 = vst [vmem:[#allocation2 + $0x10] sm:$0xff] %v293
        %v297 = vld [vmem:[%s2] sm:$0xff]
        %v298 = vld [vmem:[%s2 + $0x8] sm:$0xff]
        %v299 = vld [vmem:[#allocation2] sm:$0xff]
        %v300 = vld [vmem:[#allocation2 + $0x8] sm:$0xff]
        %v301 = vld [vmem:[#allocation2 + $0x10] sm:$0xff]
        %v302 = vld [vmem:[%s3] sm:$0xff]
        %v303 = vld [vmem:[%s3 + $0x8] sm:$0xff]
        %305 = vset.pattern.permute.xlu0 0
        %306 = vperm.xlu0 %305, %v302
        %v307 = vpop.permute.xlu0 %306
        %310 = vset.pattern.permute.xlu0 0
        %311 = vperm.xlu0 %310, %v303
        %v312 = vpop.permute.xlu0 %311
        %vm314 = vcmask 195584
        %v316 = vsel %vm314, %v297, 0
        %v319 = vsel %vm314, %v298, 0
        %321 = vmatprep.subr.mxu0 0.0
        %322 = vmatpush1.msra.mxu0 0.0
        %323 = vmatprep.subr.mxu0 0.0
        %324 = vmatpush1.msra.mxu0 0.0
        %325 = vmatprep.subr.mxu0 0.0
        %326 = vmatpush1.msra.mxu0 0.0
        %327 = vmatprep.subr.mxu0 0.0
        %328 = vmatpush1.msra.mxu0 0.0
        %329 = vmatprep.subr.mxu0 0.0
        %330 = vmatpush1.msra.mxu0 0.0
        %331 = vmatprep.subr.mxu0 0.0
        %332 = vmatpush1.msra.mxu0 0.0
        %333 = vmatprep.subr.mxu0 0.0
        %334 = vmatpush1.msra.mxu0 0.0
        %335 = vmatprep.subr.mxu0 0.0
        %336 = vmatpush1.msra.mxu0 0.0
        %337 = vmatprep.subr.mxu0 0.0
        %338 = vmatpush1.msra.mxu0 0.0
        %339 = vmatprep.subr.mxu0 0.0
        %340 = vmatpush1.msra.mxu0 0.0
        %341 = vmatprep.subr.mxu0 0.0
        %342 = vmatpush1.msra.mxu0 0.0
        %343 = vmatprep.subr.mxu0 0.0
        %344 = vmatpush1.msra.mxu0 0.0
        %345 = vmatprep.subr.mxu0 0.0
        %346 = vmatpush1.msra.mxu0 0.0
        %347 = vmatprep.subr.mxu0 0.0
        %348 = vmatpush1.msra.mxu0 %v301
        %349 = vmatprep.subr.mxu0 0.0
        %350 = vmatpush1.msra.mxu0 %v300
        %351 = vmatprep.subr.mxu0 0.0
        %352 = vmatpush1.msra.mxu0 %v299
        %353 = vmatprep.subr.mxu0 0.0
        %354 = vmatpush2.msra.mxu0 0.0
        %355 = vmatprep.subr.mxu0 0.0
        %356 = vmatpush2.msra.mxu0 0.0
        %357 = vmatprep.subr.mxu0 0.0
        %358 = vmatpush2.msra.mxu0 0.0
        %359 = vmatprep.subr.mxu0 0.0
        %360 = vmatpush2.msra.mxu0 0.0
        %361 = vmatprep.subr.mxu0 0.0
        %362 = vmatpush2.msra.mxu0 0.0
        %363 = vmatprep.subr.mxu0 0.0
        %364 = vmatpush2.msra.mxu0 0.0
        %365 = vmatprep.subr.mxu0 0.0
        %366 = vmatpush2.msra.mxu0 0.0
        %367 = vmatprep.subr.mxu0 0.0
        %368 = vmatpush2.msra.mxu0 0.0
        %369 = vmatprep.subr.mxu0 0.0
        %370 = vmatpush2.msra.mxu0 0.0
        %371 = vmatprep.subr.mxu0 0.0
        %372 = vmatpush2.msra.mxu0 0.0
        %373 = vmatprep.subr.mxu0 0.0
        %374 = vmatpush2.msra.mxu0 0.0
        %375 = vmatprep.subr.mxu0 0.0
        %376 = vmatpush2.msra.mxu0 0.0
        %377 = vmatprep.subr.mxu0 0.0
        %378 = vmatpush2.msra.mxu0 0.0
        %379 = vmatprep.subr.mxu0 0.0
        %380 = vmatpush2.msra.mxu0 0.0
        %381 = vmatprep.subr.mxu0 0.0
        %382 = vmatpush2.msra.mxu0 0.0
        %383 = vmatprep.subr.mxu0 0.0
        %384 = vmatpush2.msra.mxu0 0.0
        %385 = vmatprep.mubr.f32.mxu0 0.0
        %386 = vmatmul.mubr.f32.gmra.mxu0 %v316
        %v387 = vpop.f32.mrf.mxu0
        %v388 = vadd.f32 %v307, %v387
        %v389 = vpop.f32.mrf.mxu0
        %390 = vmatprep.mubr.f32.mxu0 0.0
        %391 = vmatmul.mubr.f32.gmra.mxu0 %v319
        %v392 = vpop.f32.mrf.mxu0
        %v393 = vadd.f32 %v312, %v392
        %v394 = vpop.f32.mrf.mxu0
        %395 = vdwg.mxu0
        %v396 = vmax.f32 %v388, 0.0
        %v397 = vmax.f32 %v393, 0.0
        %v398 = vld [vmem:[#allocation2 + $0x8] sm:$0xff]
        %v399 = vld [vmem:[%s4] sm:$0xff]
        %v400 = vld [vmem:[%s4 + $0x8] sm:$0xff]
        %vm401 = vcmask 64512
        %v403 = vsel %vm401, %v399, 0
        %v406 = vsel %vm401, %v400, 0
        %408 = vmatprep.subr.mxu0 0.0
        %409 = vmatpush1.msra.mxu0 0.0
        %410 = vmatprep.subr.mxu0 0.0
        %411 = vmatpush1.msra.mxu0 0.0
        %412 = vmatprep.subr.mxu0 0.0
        %413 = vmatpush1.msra.mxu0 0.0
        %414 = vmatprep.subr.mxu0 0.0
        %415 = vmatpush1.msra.mxu0 0.0
        %416 = vmatprep.subr.mxu0 0.0
        %417 = vmatpush1.msra.mxu0 0.0
        %418 = vmatprep.subr.mxu0 0.0
        %419 = vmatpush1.msra.mxu0 0.0
        %420 = vmatprep.subr.mxu0 0.0
        %421 = vmatpush1.msra.mxu0 0.0
        %422 = vmatprep.subr.mxu0 0.0
        %423 = vmatpush1.msra.mxu0 0.0
        %424 = vmatprep.subr.mxu0 0.0
        %425 = vmatpush1.msra.mxu0 0.0
        %426 = vmatprep.subr.mxu0 0.0
        %427 = vmatpush1.msra.mxu0 0.0
        %428 = vmatprep.subr.mxu0 0.0
        %429 = vmatpush1.msra.mxu0 0.0
        %430 = vmatprep.subr.mxu0 0.0
        %431 = vmatpush1.msra.mxu0 0.0
        %432 = vmatprep.subr.mxu0 0.0
        %433 = vmatpush1.msra.mxu0 0.0
        %434 = vmatprep.subr.mxu0 0.0
        %435 = vmatpush1.msra.mxu0 0.0
        %436 = vmatprep.subr.mxu0 0.0
        %437 = vmatpush1.msra.mxu0 0.0
        %438 = vmatprep.subr.mxu0 0.0
        %439 = vmatpush1.msra.mxu0 %v398
        %440 = vmatprep.subr.mxu0 0.0
        %441 = vmatpush2.msra.mxu0 0.0
        %442 = vmatprep.subr.mxu0 0.0
        %443 = vmatpush2.msra.mxu0 0.0
        %444 = vmatprep.subr.mxu0 0.0
        %445 = vmatpush2.msra.mxu0 0.0
        %446 = vmatprep.subr.mxu0 0.0
        %447 = vmatpush2.msra.mxu0 0.0
        %448 = vmatprep.subr.mxu0 0.0
        %449 = vmatpush2.msra.mxu0 0.0
        %450 = vmatprep.subr.mxu0 0.0
        %451 = vmatpush2.msra.mxu0 0.0
        %452 = vmatprep.subr.mxu0 0.0
        %453 = vmatpush2.msra.mxu0 0.0
        %454 = vmatprep.subr.mxu0 0.0
        %455 = vmatpush2.msra.mxu0 0.0
        %456 = vmatprep.subr.mxu0 0.0
        %457 = vmatpush2.msra.mxu0 0.0
        %458 = vmatprep.subr.mxu0 0.0
        %459 = vmatpush2.msra.mxu0 0.0
        %460 = vmatprep.subr.mxu0 0.0
        %461 = vmatpush2.msra.mxu0 0.0
        %462 = vmatprep.subr.mxu0 0.0
        %463 = vmatpush2.msra.mxu0 0.0
        %464 = vmatprep.subr.mxu0 0.0
        %465 = vmatpush2.msra.mxu0 0.0
        %466 = vmatprep.subr.mxu0 0.0
        %467 = vmatpush2.msra.mxu0 0.0
        %468 = vmatprep.subr.mxu0 0.0
        %469 = vmatpush2.msra.mxu0 0.0
        %470 = vmatprep.subr.mxu0 0.0
        %471 = vmatpush2.msra.mxu0 0.0
        %472 = vmatprep.mubr.f32.mxu0 0.0
        %473 = vmatmul.mubr.f32.gmra.mxu0 %v403
        %v474 = vpop.f32.mrf.mxu0
        %v475 = vadd.f32 0.0, %v474
        %v476 = vpop.f32.mrf.mxu0
        %477 = vmatprep.mubr.f32.mxu0 0.0
        %478 = vmatmul.mubr.f32.gmra.mxu0 %v406
        %v479 = vpop.f32.mrf.mxu0
        %v480 = vadd.f32 0.0, %v479
        %v481 = vpop.f32.mrf.mxu0
        %482 = vdwg.mxu0
        %v483 = vadd.f32 %v396, %v475
        %v484 = vadd.f32 %v397, %v480
        %485 = vst [vmem:[%s258] sm:$0xff] %v483
        %486 = vst [vmem:[%s258 + $0x8] sm:$0xff] %v484
        %s487 = sand.u32 %s160, 1
        %s488 = scalar_lea.sflag [#allocation4], %s487
        %s489 = sand.u32 %s160, 1
        %s490 = smul.addr %s489, 16
        %s491 = scalar_lea.vmem [#allocation3], %s490
        // Predicated region
        $region41: #{tpu_custom_call.1} parent=39 // pred_check
          %p492 = pneg %p170
        $region42: #{tpu_custom_call.1} parent=39 // pred_check_branch
          %494 = sbr.rel (%p492) target = $region44
        $region43: #{tpu_custom_call.1} parent=39 // pred_region
          %s496 = ssub.s32 256, 256
          %497 = vsyncadd %s488, %s496
          %s498 = smul.addr %s23, 2
          %s499 = sadd.s32 %s24, %s498
          %s500 = smul.addr %s499, 128
          %s501 = scalar_lea.hbm %s5, %s500
          %s502 = sshll.u32 %s491, 4
          %s503 = int_to_ptr.vmem [resolvable:$true] %s502
          %508 = dma.vmem_to_hbm [thread:$0]  %s503, 256, %s501, %s488, 128, 128, 8
        $region44: #{tpu_custom_call.1} parent=39 // pred_fallthru
          _
      $region40: #{tpu_custom_call.1} parent=5 // pred_fallthru
        _
      %p509 = scmp.le.s32.totalorder 2, %s14
      // Predicated region
      $region45: #{tpu_custom_call.1} parent=5 // pred_check
        %p510 = pneg %p509
      $region46: #{tpu_custom_call.1} parent=5 // pred_check_branch
        %512 = sbr.rel (%p510) target = $region48
      $region47: #{tpu_custom_call.1} parent=5 // pred_region
        %s513 = ssub.s32 %s14, 2
        // Predicated region
        $region49: #{tpu_custom_call.1} parent=47 // pred_check
          %p514 = pneg %p176
        $region50: #{tpu_custom_call.1} parent=47 // pred_check_branch
          %516 = sbr.rel (%p514) target = $region52
        $region51: #{tpu_custom_call.1} parent=47 // pred_region
          %s517 = sand.u32 %s161, 1
          %s518 = scalar_lea.sflag [#allocation4], %s517
          %s519 = sand.u32 %s161, 1
          %s520 = smul.addr %s519, 16
          %s521 = scalar_lea.vmem [#allocation3], %s520
          %522 = dma.done %s518, 256
        $region52: #{tpu_custom_call.1} parent=47 // pred_fallthru
          _
      $region48: #{tpu_custom_call.1} parent=5 // pred_fallthru
        _
    $region6: #{tpu_custom_call.1} parent=1 // loop_footer
      %s18 = sadd.s32 1, %s14
    $region7: #{tpu_custom_call.1} parent=1 // loop_footer_branch
      %13 = sbr.rel target = $region3
    $region8: #{tpu_custom_call.1} parent=1 // loop_exit
      _
    %523 = vsyncpa [#allocation4], 1
    %s524 = scalar_lea.sflag [#allocation4], 1
    %525 = vsyncpa %s524, 1

</llo_original>
